<compile_context>
chip_gen: v6e
topology: v6e:2x2x1
jax: 0.10.0
libtpu: 0.0.40
codegen_flags: <defaults>
</compile_context>

<pallas_src>
import jax
import jax.numpy as jnp
from jax.experimental import pallas as pl
from jax.experimental.pallas import tpu as pltpu


FC3_LANES = 128                       # fc3 weight/bias are lane-padded to 128
_VMEM_BUDGET_BYTES = 16 * 1024 * 1024  # per-step working-set target (all gens)
_VMEM_LIMIT_BYTES = 32 * 1024 * 1024   # explicit scoped limit (v5e default is 16 MiB)


def _round_up(x, m):
    return ((x + m - 1) // m) * m


def _cdiv(a, b):
    return (a + b - 1) // b


def _lane_pad(n):
    return _round_up(max(int(n), 1), 128)


# --------------------------------------------------------------------------
# Kernel: one batch tile of the 3-layer MLP (packed layout).
# --------------------------------------------------------------------------
def critic_kernel(x_ref, w1_ref, b1_ref, w2_ref, b2_ref, w3_ref, b3_ref, v_ref):
    """x_ref:(TM,Kin) w1:(Kin,Hp) w2:(Hp,Hp) w3:(Hp,128) -> v_ref:(TM,pack)."""
    cdt = w2_ref.dtype  # matmul operand dtype (f32 or bf16); accumulation is f32

    x = x_ref[...]

    # fc1 + relu (MXU, f32 accumulation; bias-add / ReLU stay f32).
    h1 = jnp.dot(x, w1_ref[...], preferred_element_type=jnp.float32) + b1_ref[...]
    h1 = jnp.maximum(h1, 0.0)

    # fc2 + relu.
    h2 = jnp.dot(h1.astype(cdt), w2_ref[...],
                 preferred_element_type=jnp.float32) + b2_ref[...]
    h2 = jnp.maximum(h2, 0.0)

    # fc3 + relu: f32 matmul against a lane-padded (Hp, 128) weight slab
    # (one MXU pass regardless of pack); keep only the first `pack` lanes.
    v = jnp.dot(h2, w3_ref[...], preferred_element_type=jnp.float32) + b3_ref[...]
    v = jnp.maximum(v, 0.0)
    v_ref[...] = v[:, : v_ref.shape[-1]].astype(v_ref.dtype)


# --------------------------------------------------------------------------
# Wrapper-side packing helpers.
# --------------------------------------------------------------------------
def _choose_pack(num_inputs, hidden_size):
    """Samples packed per 128-lane row (1 = unpacked fallback)."""
    if num_inputs <= 0 or 128 % num_inputs != 0:
        return 1
    pack = 128 // num_inputs
    # Keep the block-diagonal fc2 weights (pack*H)^2 modest / VMEM-resident.
    while pack > 1 and pack * hidden_size > 1024:
        pack //= 2
    return max(pack, 1)


def _block_diag(w, pack):
    """(a, b) -> (pack*a, pack*b) block-diagonal replication of w."""
    if pack == 1:
        return w
    a, b = w.shape
    eye = jnp.eye(pack, dtype=w.dtype)
    return (eye[:, None, :, None] * w[None, :, None, :]).reshape(pack * a, pack * b)


def _prepare_params(params, pack, compute_dtype):
    w1, b1, w2, b2, w3, b3 = params
    w1p = _block_diag(w1.astype(compute_dtype), pack)                  # (Kin, Hp)
    w2p = _block_diag(w2.astype(compute_dtype), pack)                  # (Hp, Hp)
    b1p = jnp.tile(b1.astype(jnp.float32).reshape(1, -1), (1, pack))   # (1, Hp)
    b2p = jnp.tile(b2.astype(jnp.float32).reshape(1, -1), (1, pack))   # (1, Hp)
    w3p = _block_diag(w3.astype(jnp.float32).reshape(-1, 1), pack)     # (Hp, pack)
    w3p = jnp.pad(w3p, ((0, 0), (0, FC3_LANES - pack)))                # (Hp, 128)
    b3p = jnp.tile(b3.astype(jnp.float32).reshape(1, 1), (1, pack))
    b3p = jnp.pad(b3p, ((0, 0), (0, FC3_LANES - pack)))                # (1, 128)
    return w1p, b1p, w2p, b2p, w3p, b3p


def _pick_tile_rows(rows_aligned, kin, hp, pack, sub, xbytes, block_rows):
    """Packed rows per grid step, from a lane-padded VMEM budget."""
    per_row = (2 * _lane_pad(kin) * xbytes        # x block (2 pipeline buffers)
               + 2 * _lane_pad(pack) * 4          # out block (2 pipeline buffers)
               + 2 * _lane_pad(hp) * 4            # h1 / h2 f32 temporaries
               + FC3_LANES * 4)                   # fc3 pre-slice temporary
    fixed = 2 * (_round_up(kin, 8) * _lane_pad(hp) * xbytes    # w1
                 + _round_up(hp, 8) * _lane_pad(hp) * xbytes   # w2
                 + _round_up(hp, 8) * FC3_LANES * 4            # w3
                 + 3 * _lane_pad(hp) * 4)                      # biases
    tm = (_VMEM_BUDGET_BYTES - fixed) // per_row
    tm = max(sub, (tm // sub) * sub)
    tm = min(tm, 8192)  # step overhead is already well amortized by here
    if block_rows is not None:
        tm = min(tm, max(sub, _round_up(_cdiv(block_rows, pack), sub)))
    tm = min(tm, rows_aligned)
    # v7x megacore: keep >= 2 grid steps whenever the batch allows it so the
    # ("parallel",) batch axis can feed both TensorCores.
    if rows_aligned >= 2 * sub:
        tm = min(tm, _round_up(_cdiv(rows_aligned, 2), sub))
    return tm


def _critic_xla(x, params):
    """Plain fused XLA MLP (tiny-batch fast path)."""
    w1, b1, w2, b2, w3, b3 = params
    f32 = jnp.float32
    h = jnp.maximum(x.astype(f32) @ w1.astype(f32) + b1.astype(f32).reshape(1, -1), 0.0)
    h = jnp.maximum(h @ w2.astype(f32) + b2.astype(f32).reshape(1, -1), 0.0)
    return jnp.maximum(h @ w3.astype(f32).reshape(-1, 1) + b3.astype(f32).reshape(1, 1), 0.0)


# --------------------------------------------------------------------------
# Forward pass.
# --------------------------------------------------------------------------
def critic_forward(x, params, *, block_rows=None, input_dtype=None,
                   min_pallas_batch=1024):
    """x: (B, num_inputs) -> (B, 1) f32 value estimates."""
    if x.ndim != 2:
        raise ValueError("x must be (batch, num_inputs)")
    B, F = x.shape
    H = params[0].shape[1]

    # Tiny batches: the fixed pallas_call launch + pipeline overhead dominates;
    # let XLA fuse the 3-layer MLP instead.
    if B < min_pallas_batch:
        return _critic_xla(x, params)

    # bf16 MXU operands only when the caller asks, or when x already arrives in
    # bf16 (so we do not pay an extra HBM pass just to downcast x).
    if input_dtype is not None:
        compute_dtype = jnp.dtype(input_dtype)
    elif x.dtype == jnp.bfloat16:
        compute_dtype = jnp.dtype(jnp.bfloat16)
    else:
        compute_dtype = jnp.dtype(jnp.float32)
    x = x.astype(compute_dtype)
    xbytes = compute_dtype.itemsize
    sub = 16 if xbytes == 2 else 8  # sublane alignment of the batch tile

    # Pack `pack` samples per 128-lane row (free row-major reshape) and use
    # block-diagonal weights so x / h1 / h2 are lane-dense and MXU-shaped.
    pack = _choose_pack(F, H)
    kin, hp = pack * F, pack * H
    w1p, b1p, w2p, b2p, w3p, b3p = _prepare_params(params, pack, compute_dtype)

    rows = _cdiv(B, pack)
    rows_aligned = _round_up(rows, sub)
    tm = _pick_tile_rows(rows_aligned, kin, hp, pack, sub, xbytes, block_rows)
    rows_pad = _round_up(rows_aligned, tm)
    b_pad = rows_pad * pack
    if b_pad != B:
        x = jnp.pad(x, ((0, b_pad - B), (0, 0)))
    x_packed = x.reshape(rows_pad, kin)
    num_tiles = rows_pad // tm

    cost = pl.CostEstimate(
        flops=2 * rows_pad * (kin * hp + hp * hp + hp * FC3_LANES),
        transcendentals=0,
        bytes_accessed=(rows_pad * kin * xbytes                 # x (streamed)
                        + (kin * hp + hp * hp) * xbytes         # w1, w2 (resident)
                        + (hp * FC3_LANES + 2 * hp + FC3_LANES) * 4
                        + rows_pad * pack * 4),                 # output
    )

    out = pl.pallas_call(
        critic_kernel,
        out_shape=jax.ShapeDtypeStruct((rows_pad, pack), jnp.float32),
        grid_spec=pltpu.PrefetchScalarGridSpec(
            num_scalar_prefetch=0,
            grid=(num_tiles,),
            in_specs=[
                pl.BlockSpec((tm, kin), lambda i: (i, 0)),        # x: streamed per tile
                pl.BlockSpec((kin, hp), lambda i: (0, 0)),        # w1: VMEM-resident
                pl.BlockSpec((1, hp), lambda i: (0, 0)),          # b1
                pl.BlockSpec((hp, hp), lambda i: (0, 0)),         # w2
                pl.BlockSpec((1, hp), lambda i: (0, 0)),          # b2
                pl.BlockSpec((hp, FC3_LANES), lambda i: (0, 0)),  # w3 (lane-padded)
                pl.BlockSpec((1, FC3_LANES), lambda i: (0, 0)),   # b3 (lane-padded)
            ],
            out_specs=pl.BlockSpec((tm, pack), lambda i: (i, 0)),
        ),
        compiler_params=pltpu.CompilerParams(
            dimension_semantics=("parallel",),       # batch tiles -> v7x megacore
            vmem_limit_bytes=_VMEM_LIMIT_BYTES,      # > v5e 16 MiB default, < v7x physical
        ),
        cost_estimate=cost,
    )(x_packed, w1p, b1p, w2p, b2p, w3p, b3p)

    return out.reshape(b_pad)[:B].reshape(B, 1)


# --------------------------------------------------------------------------
# Reference + deterministic init + tests.
# --------------------------------------------------------------------------
def init_params(key, num_inputs, hidden_size, dtype=jnp.float32):
    """Deterministic synthetic init (PyTorch-Linear-like uniform ranges)."""
    ks = jax.random.split(key, 6)

    def uni(k, shape, fan_in):
        bound = 1.0 / jnp.sqrt(fan_in)
        return jax.random.uniform(k, shape, dtype, -bound, bound)

    w1 = uni(ks[0], (num_inputs, hidden_size), num_inputs)
    b1 = uni(ks[1], (1, hidden_size), num_inputs)
    w2 = uni(ks[2], (hidden_size, hidden_size), hidden_size)
    b2 = uni(ks[3], (1, hidden_size), hidden_size)
    w3 = uni(ks[4], (hidden_size, 1), hidden_size)
    b3 = uni(ks[5], (1, 1), hidden_size)
    return (w1, b1, w2, b2, w3, b3)


def critic_ref(x, params):
    """Pure-JAX reference matching the PyTorch forward."""
    w1, b1, w2, b2, w3, b3 = params
    h1 = jnp.maximum(x.astype(jnp.float32) @ w1 + b1, 0.0)
    h2 = jnp.maximum(h1 @ w2 + b2, 0.0)
    return jnp.maximum(h2 @ w3 + b3, 0.0)


if __name__ == "__main__":
    key = jax.random.PRNGKey(0)
    k_x, k_p, k_x2, k_p2, k_x3 = jax.random.split(key, 5)

    num_inputs, hidden_size = 16, 32
    params = init_params(k_p, num_inputs, hidden_size)

    # 1) Small batch, Pallas path forced (packed: 8 samples per 128-lane row).
    x = jax.random.normal(k_x, (8, num_inputs), jnp.float32)
    v = jax.block_until_ready(critic_forward(x, params, min_pallas_batch=0))
    v_ref = critic_ref(x, params)
    assert v.shape == (8, 1)
    assert jnp.allclose(v, v_ref, atol=1e-4, rtol=1e-4), "f32 packed mismatch vs reference"

    # 2) Multi-tile: padding + >= 2 grid steps on the ("parallel",) batch axis.
    x_big = jax.random.normal(k_x2, (600, num_inputs), jnp.float32)
    v_big = jax.block_until_ready(critic_forward(x_big, params, min_pallas_batch=0))
    v_big_ref = critic_ref(x_big, params)
    assert v_big.shape == (600, 1)
    assert jnp.allclose(v_big, v_big_ref, atol=1e-4, rtol=1e-4), "tiled mismatch vs reference"

    # 3) bf16 MXU operands (auto-selected because x arrives in bf16); f32 accumulation.
    x_bf16 = x_big.astype(jnp.bfloat16)
    v_bf16 = jax.block_until_ready(critic_forward(x_bf16, params, min_pallas_batch=0))
    v_bf16_ref = critic_ref(x_bf16.astype(jnp.float32), params)
    assert v_bf16.shape == (600, 1)
    assert jnp.allclose(v_bf16, v_bf16_ref, atol=5e-2, rtol=5e-2), "bf16 mismatch vs reference"

    # 4) Unpacked fallback (num_inputs does not divide 128 -> pack=1).
    params_odd = init_params(k_p2, 24, hidden_size)
    x_odd = jax.random.normal(k_x3, (64, 24), jnp.float32)
    v_odd = jax.block_until_ready(critic_forward(x_odd, params_odd, min_pallas_batch=0))
    assert v_odd.shape == (64, 1)
    assert jnp.allclose(v_odd, critic_ref(x_odd, params_odd), atol=1e-4, rtol=1e-4), \
        "pack=1 mismatch vs reference"

    # 5) Tiny-batch fast path (stays in plain XLA, same semantics).
    v_fast = jax.block_until_ready(critic_forward(x, params))
    assert jnp.allclose(v_fast, v_ref, atol=1e-4, rtol=1e-4), "fast-path mismatch vs reference"

    print("KERNEL_OK")
</pallas_src>

<mosaic_0001>
module attributes {stable_mosaic.version = 11 : i64} {
  func.func @critic_kernel(%arg0: i32, %arg1: memref<8x128xf32, #tpu.memory_space<vmem>>, %arg2: memref<128x256xf32, #tpu.memory_space<vmem>>, %arg3: memref<1x256xf32, #tpu.memory_space<vmem>>, %arg4: memref<256x256xf32, #tpu.memory_space<vmem>>, %arg5: memref<1x256xf32, #tpu.memory_space<vmem>>, %arg6: memref<256x128xf32, #tpu.memory_space<vmem>>, %arg7: memref<1x128xf32, #tpu.memory_space<vmem>>, %arg8: memref<8x8xf32, #tpu.memory_space<vmem>>) attributes {dimension_semantics = [#tpu.dimension_semantics<parallel>], iteration_bounds = array<i64: 1>, scalar_prefetch = 0 : i64, scratch_operands = 0 : i64, tpu.core_type = #tpu.core_type<tc>, window_params = [{transform_indices = @transform_0, window_bounds = array<i64: 8, 128>}, {pipeline_mode = #tpu.pipeline_mode<synchronous>, transform_indices = @transform_1, window_bounds = array<i64: 128, 256>}, {pipeline_mode = #tpu.pipeline_mode<synchronous>, transform_indices = @transform_2, window_bounds = array<i64: 1, 256>}, {pipeline_mode = #tpu.pipeline_mode<synchronous>, transform_indices = @transform_3, window_bounds = array<i64: 256, 256>}, {pipeline_mode = #tpu.pipeline_mode<synchronous>, transform_indices = @transform_4, window_bounds = array<i64: 1, 256>}, {pipeline_mode = #tpu.pipeline_mode<synchronous>, transform_indices = @transform_5, window_bounds = array<i64: 256, 128>}, {pipeline_mode = #tpu.pipeline_mode<synchronous>, transform_indices = @transform_6, window_bounds = array<i64: 1, 128>}, {transform_indices = @transform_7, window_bounds = array<i64: 8, 8>}]} {
    %c0 = arith.constant 0 : index
    %c0_0 = arith.constant 0 : index
    %0 = vector.load %arg1[%c0, %c0_0] : memref<8x128xf32, #tpu.memory_space<vmem>>, vector<8x128xf32>
    %c0_1 = arith.constant 0 : index
    %c0_2 = arith.constant 0 : index
    %1 = vector.load %arg2[%c0_1, %c0_2] : memref<128x256xf32, #tpu.memory_space<vmem>>, vector<128x256xf32>
    %cst = arith.constant dense<0.000000e+00> : vector<8x256xf32>
    %2 = tpu.matmul %0, %1, %cst {dimension_numbers = #tpu.dot_dimension_numbers<[1], [0], [0], [1], [0, 0, 1, 1], [], []>} : vector<8x128xf32>, vector<128x256xf32>, vector<8x256xf32> -> vector<8x256xf32>
    %c0_3 = arith.constant 0 : index
    %c0_4 = arith.constant 0 : index
    %3 = vector.load %arg3[%c0_3, %c0_4] : memref<1x256xf32, #tpu.memory_space<vmem>>, vector<1x256xf32>
    %4 = vector.broadcast %3 : vector<1x256xf32> to vector<8x256xf32>
    %5 = arith.addf %2, %4 : vector<8x256xf32>
    %cst_5 = arith.constant 0.000000e+00 : f32
    %6 = vector.broadcast %cst_5 : f32 to vector<8x256xf32>
    %7 = arith.maximumf %5, %6 : vector<8x256xf32>
    %c0_6 = arith.constant 0 : index
    %c0_7 = arith.constant 0 : index
    %8 = vector.load %arg4[%c0_6, %c0_7] : memref<256x256xf32, #tpu.memory_space<vmem>>, vector<256x256xf32>
    %cst_8 = arith.constant dense<0.000000e+00> : vector<8x256xf32>
    %9 = tpu.matmul %7, %8, %cst_8 {dimension_numbers = #tpu.dot_dimension_numbers<[1], [0], [0], [1], [0, 0, 1, 1], [], []>} : vector<8x256xf32>, vector<256x256xf32>, vector<8x256xf32> -> vector<8x256xf32>
    %c0_9 = arith.constant 0 : index
    %c0_10 = arith.constant 0 : index
    %10 = vector.load %arg5[%c0_9, %c0_10] : memref<1x256xf32, #tpu.memory_space<vmem>>, vector<1x256xf32>
    %11 = vector.broadcast %10 : vector<1x256xf32> to vector<8x256xf32>
    %12 = arith.addf %9, %11 : vector<8x256xf32>
    %cst_11 = arith.constant 0.000000e+00 : f32
    %13 = vector.broadcast %cst_11 : f32 to vector<8x256xf32>
    %14 = arith.maximumf %12, %13 : vector<8x256xf32>
    %c0_12 = arith.constant 0 : index
    %c0_13 = arith.constant 0 : index
    %15 = vector.load %arg6[%c0_12, %c0_13] : memref<256x128xf32, #tpu.memory_space<vmem>>, vector<256x128xf32>
    %cst_14 = arith.constant dense<0.000000e+00> : vector<8x128xf32>
    %16 = tpu.matmul %14, %15, %cst_14 {dimension_numbers = #tpu.dot_dimension_numbers<[1], [0], [0], [1], [0, 0, 1, 1], [], []>} : vector<8x256xf32>, vector<256x128xf32>, vector<8x128xf32> -> vector<8x128xf32>
    %c0_15 = arith.constant 0 : index
    %c0_16 = arith.constant 0 : index
    %17 = vector.load %arg7[%c0_15, %c0_16] : memref<1x128xf32, #tpu.memory_space<vmem>>, vector<1x128xf32>
    %18 = vector.broadcast %17 : vector<1x128xf32> to vector<8x128xf32>
    %19 = arith.addf %16, %18 : vector<8x128xf32>
    %cst_17 = arith.constant 0.000000e+00 : f32
    %20 = vector.broadcast %cst_17 : f32 to vector<8x128xf32>
    %21 = arith.maximumf %19, %20 : vector<8x128xf32>
    %22 = vector.extract_strided_slice %21 {offsets = [0, 0], sizes = [8, 8], strides = [1, 1]} : vector<8x128xf32> to vector<8x8xf32>
    %c0_18 = arith.constant 0 : index
    %c0_19 = arith.constant 0 : index
    %23 = vector.load %arg8[%c0_18, %c0_19] : memref<8x8xf32, #tpu.memory_space<vmem>>, vector<8x8xf32>
    tpu.vector_store %arg8[%c0_18, %c0_19], %22 {strides = array<i32>} : memref<8x8xf32, #tpu.memory_space<vmem>>, vector<8x8xf32>,
    return
  }
  func.func @transform_0(%arg0: i32) -> (i32, i32) {
    %c0_i32 = arith.constant 0 : i32
    %c0_i32_0 = arith.constant 0 : i32
    return %arg0, %c0_i32 : i32, i32
  }
  func.func @transform_1(%arg0: i32) -> (i32, i32) {
    %c0_i32 = arith.constant 0 : i32
    %c0_i32_0 = arith.constant 0 : i32
    %c0_i32_1 = arith.constant 0 : i32
    return %c0_i32, %c0_i32_0 : i32, i32
  }
  func.func @transform_2(%arg0: i32) -> (i32, i32) {
    %c0_i32 = arith.constant 0 : i32
    %c0_i32_0 = arith.constant 0 : i32
    %c0_i32_1 = arith.constant 0 : i32
    return %c0_i32, %c0_i32_0 : i32, i32
  }
  func.func @transform_3(%arg0: i32) -> (i32, i32) {
    %c0_i32 = arith.constant 0 : i32
    %c0_i32_0 = arith.constant 0 : i32
    %c0_i32_1 = arith.constant 0 : i32
    return %c0_i32, %c0_i32_0 : i32, i32
  }
  func.func @transform_4(%arg0: i32) -> (i32, i32) {
    %c0_i32 = arith.constant 0 : i32
    %c0_i32_0 = arith.constant 0 : i32
    %c0_i32_1 = arith.constant 0 : i32
    return %c0_i32, %c0_i32_0 : i32, i32
  }
  func.func @transform_5(%arg0: i32) -> (i32, i32) {
    %c0_i32 = arith.constant 0 : i32
    %c0_i32_0 = arith.constant 0 : i32
    %c0_i32_1 = arith.constant 0 : i32
    return %c0_i32, %c0_i32_0 : i32, i32
  }
  func.func @transform_6(%arg0: i32) -> (i32, i32) {
    %c0_i32 = arith.constant 0 : i32
    %c0_i32_0 = arith.constant 0 : i32
    %c0_i32_1 = arith.constant 0 : i32
    return %c0_i32, %c0_i32_0 : i32, i32
  }
  func.func @transform_7(%arg0: i32) -> (i32, i32) {
    %c0_i32 = arith.constant 0 : i32
    %c0_i32_0 = arith.constant 0 : i32
    return %arg0, %c0_i32 : i32, i32
  }
}

</mosaic_0001>

<llo_original>
// kernel: tpu_custom_call.1
$region0: #{tpu_custom_call.1}
  #allocation0 [shape = 'u32[]', space=smem, size = 0x4, offset = 0x4, fixed_abs, tag = 'smem constant byte address 0x4 - core index']
  #allocation1 [shape = 'u32[144,128]{1,0:T(1,128)}', space=vmem, size = 0x12000, scoped, tag = 'internal scratch']
  %s0 = inlined_call_operand.hbm [shape: f32[8,128], index: 0, kind: input, shape index: {}]
  %s1 = inlined_call_operand.hbm [shape: f32[128,256], index: 1, kind: input, shape index: {}]
  %s2 = inlined_call_operand.vmem [shape: f32[1,256], index: 2, kind: input, shape index: {}]
  %s3 = inlined_call_operand.hbm [shape: f32[256,256], index: 3, kind: input, shape index: {}]
  %s4 = inlined_call_operand.vmem [shape: f32[1,256], index: 4, kind: input, shape index: {}]
  %s5 = inlined_call_operand.hbm [shape: f32[256,128], index: 5, kind: input, shape index: {}]
  %s6 = inlined_call_operand.vmem [shape: f32[1,128], index: 6, kind: input, shape index: {}]
  %s7 = inlined_call_operand.hbm [shape: f32[8,8], index: 7, kind: output, shape index: {}]
  %s8 = sld [smem:[#allocation0]]
  $region54: #{tpu_custom_call.1} parent=0
    _
  %s10 = ssub.s32 1, %s8
  %s11 = scalar_select 0, %s10, %s8
  $region1: #{tpu_custom_call.1} parent=0
    #allocation2 [shape = 'u8[4096]{0}', space=vmem, size = 0x1000, scoped, tag = 'input window, operand 0, single buffered']
    #allocation3 [shape = 's32[1]{0}', space=sflag, size = 0x4, scoped, tag = 'scoped memory for tpu_custom_call.1']
    #allocation4 [shape = 's32[1]{0}', space=sflag, size = 0x4, scoped, tag = 'scoped memory for tpu_custom_call.1']
    #allocation5 [shape = 'u8[131072]{0}', space=vmem, size = 0x20000, scoped, tag = 'input window, operand 1, single buffered']
    #allocation6 [shape = 's32[1]{0}', space=sflag, size = 0x4, scoped, tag = 'scoped memory for tpu_custom_call.1']
    #allocation7 [shape = 'u8[262144]{0}', space=vmem, size = 0x40000, scoped, tag = 'input window, operand 3, single buffered']
    #allocation8 [shape = 'u8[131072]{0}', space=vmem, size = 0x20000, scoped, tag = 'input window, operand 5, single buffered']
    #allocation9 [shape = 's32[1]{0}', space=sflag, size = 0x4, scoped, tag = 'scoped memory for tpu_custom_call.1']
    #allocation10 [shape = 'u8[4096]{0}', space=vmem, size = 0x1000, scoped, tag = 'output window, operand 0, single buffered']
    %12 = vsyncpa [#allocation3], 0
    %13 = vsyncpa [#allocation6], 0
    %14 = vsyncpa [#allocation9], 0
    %15 = vsyncpa [#allocation4], 0
    // Predicated region
    $region2: #{tpu_custom_call.1} parent=1 // pred_check
      _
    $region3: #{tpu_custom_call.1} parent=1 // pred_check_branch
      %17 = sbr.rel (0) target = $region5
    $region4: #{tpu_custom_call.1} parent=1 // pred_region
      %s19 = ssub.s32 128, 128
      %20 = vsyncadd [#allocation3], %s19
      %s22 = sshll.u32 [#allocation2], 4
      %s23 = int_to_ptr.vmem [resolvable:$true] %s22
      %25 = dma.hbm_to_vmem [thread:$0]  %s0, 128, %s23, [#allocation3]
    $region5: #{tpu_custom_call.1} parent=1 // pred_fallthru
      _
    // Predicated region
    $region6: #{tpu_custom_call.1} parent=1 // pred_check
      _
    $region7: #{tpu_custom_call.1} parent=1 // pred_check_branch
      %27 = sbr.rel (0) target = $region9
    $region8: #{tpu_custom_call.1} parent=1 // pred_region
      %s29 = ssub.s32 4096, 4096
      %30 = vsyncadd [#allocation6], %s29
      %s31 = sshll.u32 [#allocation5], 4
      %s32 = int_to_ptr.vmem [resolvable:$true] %s31
      %37 = dma.hbm_to_vmem [thread:$0]  %s1, 4096, %s32, [#allocation6], 256, 256, 16
    $region9: #{tpu_custom_call.1} parent=1 // pred_fallthru
      _
    // Predicated region
    $region10: #{tpu_custom_call.1} parent=1 // pred_check
      _
    $region11: #{tpu_custom_call.1} parent=1 // pred_check_branch
      %39 = sbr.rel (0) target = $region13
    $region12: #{tpu_custom_call.1} parent=1 // pred_region
      _
    $region13: #{tpu_custom_call.1} parent=1 // pred_fallthru
      _
    // Predicated region
    $region14: #{tpu_custom_call.1} parent=1 // pred_check
      _
    $region15: #{tpu_custom_call.1} parent=1 // pred_check_branch
      %41 = sbr.rel (0) target = $region17
    $region16: #{tpu_custom_call.1} parent=1 // pred_region
      %s43 = ssub.s32 8192, 8192
      %44 = vsyncadd [#allocation6], %s43
      %s45 = sshll.u32 [#allocation7], 4
      %s46 = int_to_ptr.vmem [resolvable:$true] %s45
      %51 = dma.hbm_to_vmem [thread:$0]  %s3, 8192, %s46, [#allocation6], 256, 256, 16
    $region17: #{tpu_custom_call.1} parent=1 // pred_fallthru
      _
    // Predicated region
    $region18: #{tpu_custom_call.1} parent=1 // pred_check
      _
    $region19: #{tpu_custom_call.1} parent=1 // pred_check_branch
      %53 = sbr.rel (0) target = $region21
    $region20: #{tpu_custom_call.1} parent=1 // pred_region
      _
    $region21: #{tpu_custom_call.1} parent=1 // pred_fallthru
      _
    // Predicated region
    $region22: #{tpu_custom_call.1} parent=1 // pred_check
      _
    $region23: #{tpu_custom_call.1} parent=1 // pred_check_branch
      %55 = sbr.rel (0) target = $region25
    $region24: #{tpu_custom_call.1} parent=1 // pred_region
      %s57 = ssub.s32 4096, 4096
      %58 = vsyncadd [#allocation9], %s57
      %s59 = sshll.u32 [#allocation8], 4
      %s60 = int_to_ptr.vmem [resolvable:$true] %s59
      %65 = dma.hbm_to_vmem [thread:$0]  %s5, 4096, %s60, [#allocation9], 128, 128, 8
    $region25: #{tpu_custom_call.1} parent=1 // pred_fallthru
      _
    // Predicated region
    $region26: #{tpu_custom_call.1} parent=1 // pred_check
      _
    $region27: #{tpu_custom_call.1} parent=1 // pred_check_branch
      %67 = sbr.rel (0) target = $region29
    $region28: #{tpu_custom_call.1} parent=1 // pred_region
      _
    $region29: #{tpu_custom_call.1} parent=1 // pred_fallthru
      _
    // Predicated region
    $region30: #{tpu_custom_call.1} parent=1 // pred_check
      _
    $region31: #{tpu_custom_call.1} parent=1 // pred_check_branch
      %69 = sbr.rel (0) target = $region33
    $region32: #{tpu_custom_call.1} parent=1 // pred_region
      %70 = dma.done [#allocation3], 128
    $region33: #{tpu_custom_call.1} parent=1 // pred_fallthru
      _
    // Predicated region
    $region34: #{tpu_custom_call.1} parent=1 // pred_check
      _
    $region35: #{tpu_custom_call.1} parent=1 // pred_check_branch
      %72 = sbr.rel (0) target = $region37
    $region36: #{tpu_custom_call.1} parent=1 // pred_region
      %73 = dma.done [#allocation6], 4096
    $region37: #{tpu_custom_call.1} parent=1 // pred_fallthru
      _
    // Predicated region
    $region38: #{tpu_custom_call.1} parent=1 // pred_check
      _
    $region39: #{tpu_custom_call.1} parent=1 // pred_check_branch
      %75 = sbr.rel (0) target = $region41
    $region40: #{tpu_custom_call.1} parent=1 // pred_region
      %76 = dma.done [#allocation6], 8192
    $region41: #{tpu_custom_call.1} parent=1 // pred_fallthru
      _
    // Predicated region
    $region42: #{tpu_custom_call.1} parent=1 // pred_check
      _
    $region43: #{tpu_custom_call.1} parent=1 // pred_check_branch
      %78 = sbr.rel (0) target = $region45
    $region44: #{tpu_custom_call.1} parent=1 // pred_region
      %79 = dma.done [#allocation9], 4096
    $region45: #{tpu_custom_call.1} parent=1 // pred_fallthru
      _
    %v80 = vld [vmem:[#allocation2] sm:$0xff]
    %v81 = vld [vmem:[#allocation5] sm:$0xff]
    %v82 = vld [vmem:[#allocation5 + $0x8] sm:$0xff]
    %v83 = vld [vmem:[#allocation5 + $0x10] sm:$0xff]
    %v84 = vld [vmem:[#allocation5 + $0x18] sm:$0xff]
    %v85 = vld [vmem:[#allocation5 + $0x20] sm:$0xff]
    %v86 = vld [vmem:[#allocation5 + $0x28] sm:$0xff]
    %v87 = vld [vmem:[#allocation5 + $0x30] sm:$0xff]
    %v88 = vld [vmem:[#allocation5 + $0x38] sm:$0xff]
    %v89 = vld [vmem:[#allocation5 + $0x40] sm:$0xff]
    %v90 = vld [vmem:[#allocation5 + $0x48] sm:$0xff]
    %v91 = vld [vmem:[#allocation5 + $0x50] sm:$0xff]
    %v92 = vld [vmem:[#allocation5 + $0x58] sm:$0xff]
    %v93 = vld [vmem:[#allocation5 + $0x60] sm:$0xff]
    %v94 = vld [vmem:[#allocation5 + $0x68] sm:$0xff]
    %v95 = vld [vmem:[#allocation5 + $0x70] sm:$0xff]
    %v96 = vld [vmem:[#allocation5 + $0x78] sm:$0xff]
    %v97 = vld [vmem:[#allocation5 + $0x80] sm:$0xff]
    %v98 = vld [vmem:[#allocation5 + $0x88] sm:$0xff]
    %v99 = vld [vmem:[#allocation5 + $0x90] sm:$0xff]
    %v100 = vld [vmem:[#allocation5 + $0x98] sm:$0xff]
    %v101 = vld [vmem:[#allocation5 + $0xa0] sm:$0xff]
    %v102 = vld [vmem:[#allocation5 + $0xa8] sm:$0xff]
    %v103 = vld [vmem:[#allocation5 + $0xb0] sm:$0xff]
    %v104 = vld [vmem:[#allocation5 + $0xb8] sm:$0xff]
    %v105 = vld [vmem:[#allocation5 + $0xc0] sm:$0xff]
    %v106 = vld [vmem:[#allocation5 + $0xc8] sm:$0xff]
    %v107 = vld [vmem:[#allocation5 + $0xd0] sm:$0xff]
    %v108 = vld [vmem:[#allocation5 + $0xd8] sm:$0xff]
    %v109 = vld [vmem:[#allocation5 + $0xe0] sm:$0xff]
    %v110 = vld [vmem:[#allocation5 + $0xe8] sm:$0xff]
    %v111 = vld [vmem:[#allocation5 + $0xf0] sm:$0xff]
    %v112 = vld [vmem:[#allocation5 + $0xf8] sm:$0xff]
    %v113 = vld [vmem:[%s2] sm:$0x3]
    %v115 = vlaneseq
    %v116 = vshrl.u32 %v115, 7
    %v117 = vsub.s32 0, %v116
    %v118 = vrot.slane %v113, %v117
    %v119 = vlaneseq
    %v120 = vshrl.u32 %v119, 7
    %v121 = vsub.s32 1, %v120
    %v122 = vrot.slane %v113, %v121
    %125 = vmatprep.subr.mxu0 %v112
    %126 = vmatpush1.msra.mxu0 %v111
    %127 = vmatprep.subr.mxu0 %v110
    %128 = vmatpush1.msra.mxu0 %v109
    %129 = vmatprep.subr.mxu0 %v108
    %130 = vmatpush1.msra.mxu0 %v107
    %131 = vmatprep.subr.mxu0 %v106
    %132 = vmatpush1.msra.mxu0 %v105
    %133 = vmatprep.subr.mxu0 %v104
    %134 = vmatpush1.msra.mxu0 %v103
    %135 = vmatprep.subr.mxu0 %v102
    %136 = vmatpush1.msra.mxu0 %v101
    %137 = vmatprep.subr.mxu0 %v100
    %138 = vmatpush1.msra.mxu0 %v99
    %139 = vmatprep.subr.mxu0 %v98
    %140 = vmatpush1.msra.mxu0 %v97
    %141 = vmatprep.subr.mxu0 %v96
    %142 = vmatpush1.msra.mxu0 %v95
    %143 = vmatprep.subr.mxu0 %v94
    %144 = vmatpush1.msra.mxu0 %v93
    %145 = vmatprep.subr.mxu0 %v92
    %146 = vmatpush1.msra.mxu0 %v91
    %147 = vmatprep.subr.mxu0 %v90
    %148 = vmatpush1.msra.mxu0 %v89
    %149 = vmatprep.subr.mxu0 %v88
    %150 = vmatpush1.msra.mxu0 %v87
    %151 = vmatprep.subr.mxu0 %v86
    %152 = vmatpush1.msra.mxu0 %v85
    %153 = vmatprep.subr.mxu0 %v84
    %154 = vmatpush1.msra.mxu0 %v83
    %155 = vmatprep.subr.mxu0 %v82
    %156 = vmatpush1.msra.mxu0 %v81
    %157 = vmatprep.subr.mxu0 0.0
    %158 = vmatpush2.msra.mxu0 0.0
    %159 = vmatprep.subr.mxu0 0.0
    %160 = vmatpush2.msra.mxu0 0.0
    %161 = vmatprep.subr.mxu0 0.0
    %162 = vmatpush2.msra.mxu0 0.0
    %163 = vmatprep.subr.mxu0 0.0
    %164 = vmatpush2.msra.mxu0 0.0
    %165 = vmatprep.subr.mxu0 0.0
    %166 = vmatpush2.msra.mxu0 0.0
    %167 = vmatprep.subr.mxu0 0.0
    %168 = vmatpush2.msra.mxu0 0.0
    %169 = vmatprep.subr.mxu0 0.0
    %170 = vmatpush2.msra.mxu0 0.0
    %171 = vmatprep.subr.mxu0 0.0
    %172 = vmatpush2.msra.mxu0 0.0
    %173 = vmatprep.subr.mxu0 0.0
    %174 = vmatpush2.msra.mxu0 0.0
    %175 = vmatprep.subr.mxu0 0.0
    %176 = vmatpush2.msra.mxu0 0.0
    %177 = vmatprep.subr.mxu0 0.0
    %178 = vmatpush2.msra.mxu0 0.0
    %179 = vmatprep.subr.mxu0 0.0
    %180 = vmatpush2.msra.mxu0 0.0
    %181 = vmatprep.subr.mxu0 0.0
    %182 = vmatpush2.msra.mxu0 0.0
    %183 = vmatprep.subr.mxu0 0.0
    %184 = vmatpush2.msra.mxu0 0.0
    %185 = vmatprep.subr.mxu0 0.0
    %186 = vmatpush2.msra.mxu0 0.0
    %187 = vmatprep.subr.mxu0 0.0
    %188 = vmatpush2.msra.mxu0 0.0
    %189 = vmatprep.mubr.f32.mxu0 0.0
    %190 = vmatmul.mubr.f32.gmra.mxu0 %v80
    %v191 = vpop.f32.mrf.mxu0
    %v192 = vadd.f32 %v118, %v191
    %v193 = vpop.f32.mrf.mxu0
    %v194 = vadd.f32 %v122, %v193
    %195 = vdwg.mxu0
    %v196 = vmax.f32 %v192, 0.0
    %v197 = vmax.f32 %v194, 0.0
    %v198 = vld [vmem:[#allocation7] sm:$0xff]
    %v199 = vld [vmem:[#allocation7 + $0x8] sm:$0xff]
    %v200 = vld [vmem:[#allocation7 + $0x10] sm:$0xff]
    %v201 = vld [vmem:[#allocation7 + $0x18] sm:$0xff]
    %v202 = vld [vmem:[#allocation7 + $0x20] sm:$0xff]
    %v203 = vld [vmem:[#allocation7 + $0x28] sm:$0xff]
    %v204 = vld [vmem:[#allocation7 + $0x30] sm:$0xff]
    %v205 = vld [vmem:[#allocation7 + $0x38] sm:$0xff]
    %v206 = vld [vmem:[#allocation7 + $0x40] sm:$0xff]
    %v207 = vld [vmem:[#allocation7 + $0x48] sm:$0xff]
    %v208 = vld [vmem:[#allocation7 + $0x50] sm:$0xff]
    %v209 = vld [vmem:[#allocation7 + $0x58] sm:$0xff]
    %v210 = vld [vmem:[#allocation7 + $0x60] sm:$0xff]
    %v211 = vld [vmem:[#allocation7 + $0x68] sm:$0xff]
    %v212 = vld [vmem:[#allocation7 + $0x70] sm:$0xff]
    %v213 = vld [vmem:[#allocation7 + $0x78] sm:$0xff]
    %v214 = vld [vmem:[#allocation7 + $0x80] sm:$0xff]
    %v215 = vld [vmem:[#allocation7 + $0x88] sm:$0xff]
    %v216 = vld [vmem:[#allocation7 + $0x90] sm:$0xff]
    %v217 = vld [vmem:[#allocation7 + $0x98] sm:$0xff]
    %v218 = vld [vmem:[#allocation7 + $0xa0] sm:$0xff]
    %v219 = vld [vmem:[#allocation7 + $0xa8] sm:$0xff]
    %v220 = vld [vmem:[#allocation7 + $0xb0] sm:$0xff]
    %v221 = vld [vmem:[#allocation7 + $0xb8] sm:$0xff]
    %v222 = vld [vmem:[#allocation7 + $0xc0] sm:$0xff]
    %v223 = vld [vmem:[#allocation7 + $0xc8] sm:$0xff]
    %v224 = vld [vmem:[#allocation7 + $0xd0] sm:$0xff]
    %v225 = vld [vmem:[#allocation7 + $0xd8] sm:$0xff]
    %v226 = vld [vmem:[#allocation7 + $0xe0] sm:$0xff]
    %v227 = vld [vmem:[#allocation7 + $0xe8] sm:$0xff]
    %v228 = vld [vmem:[#allocation7 + $0xf0] sm:$0xff]
    %v229 = vld [vmem:[#allocation7 + $0xf8] sm:$0xff]
    %v230 = vld [vmem:[#allocation7 + $0x100] sm:$0xff]
    %v231 = vld [vmem:[#allocation7 + $0x108] sm:$0xff]
    %v232 = vld [vmem:[#allocation7 + $0x110] sm:$0xff]
    %v233 = vld [vmem:[#allocation7 + $0x118] sm:$0xff]
    %v234 = vld [vmem:[#allocation7 + $0x120] sm:$0xff]
    %v235 = vld [vmem:[#allocation7 + $0x128] sm:$0xff]
    %v236 = vld [vmem:[#allocation7 + $0x130] sm:$0xff]
    %v237 = vld [vmem:[#allocation7 + $0x138] sm:$0xff]
    %v238 = vld [vmem:[#allocation7 + $0x140] sm:$0xff]
    %v239 = vld [vmem:[#allocation7 + $0x148] sm:$0xff]
    %v240 = vld [vmem:[#allocation7 + $0x150] sm:$0xff]
    %v241 = vld [vmem:[#allocation7 + $0x158] sm:$0xff]
    %v242 = vld [vmem:[#allocation7 + $0x160] sm:$0xff]
    %v243 = vld [vmem:[#allocation7 + $0x168] sm:$0xff]
    %v244 = vld [vmem:[#allocation7 + $0x170] sm:$0xff]
    %v245 = vld [vmem:[#allocation7 + $0x178] sm:$0xff]
    %v246 = vld [vmem:[#allocation7 + $0x180] sm:$0xff]
    %v247 = vld [vmem:[#allocation7 + $0x188] sm:$0xff]
    %v248 = vld [vmem:[#allocation7 + $0x190] sm:$0xff]
    %v249 = vld [vmem:[#allocation7 + $0x198] sm:$0xff]
    %v250 = vld [vmem:[#allocation7 + $0x1a0] sm:$0xff]
    %v251 = vld [vmem:[#allocation7 + $0x1a8] sm:$0xff]
    %v252 = vld [vmem:[#allocation7 + $0x1b0] sm:$0xff]
    %v253 = vld [vmem:[#allocation7 + $0x1b8] sm:$0xff]
    %v254 = vld [vmem:[#allocation7 + $0x1c0] sm:$0xff]
    %v255 = vld [vmem:[#allocation7 + $0x1c8] sm:$0xff]
    %v256 = vld [vmem:[#allocation7 + $0x1d0] sm:$0xff]
    %v257 = vld [vmem:[#allocation7 + $0x1d8] sm:$0xff]
    %v258 = vld [vmem:[#allocation7 + $0x1e0] sm:$0xff]
    %v259 = vld [vmem:[#allocation7 + $0x1e8] sm:$0xff]
    %v260 = vld [vmem:[#allocation7 + $0x1f0] sm:$0xff]
    %v261 = vld [vmem:[#allocation7 + $0x1f8] sm:$0xff]
    %v262 = vld [vmem:[%s4] sm:$0x3]
    %v264 = vlaneseq
    %v265 = vshrl.u32 %v264, 7
    %v266 = vsub.s32 0, %v265
    %v267 = vrot.slane %v262, %v266
    %v268 = vlaneseq
    %v269 = vshrl.u32 %v268, 7
    %v270 = vsub.s32 1, %v269
    %v271 = vrot.slane %v262, %v270
    %274 = vmatprep.subr.mxu0 %v229
    %275 = vmatpush1.msra.mxu0 %v228
    %276 = vmatprep.subr.mxu0 %v227
    %277 = vmatpush1.msra.mxu0 %v226
    %278 = vmatprep.subr.mxu0 %v225
    %279 = vmatpush1.msra.mxu0 %v224
    %280 = vmatprep.subr.mxu0 %v223
    %281 = vmatpush1.msra.mxu0 %v222
    %282 = vmatprep.subr.mxu0 %v221
    %283 = vmatpush1.msra.mxu0 %v220
    %284 = vmatprep.subr.mxu0 %v219
    %285 = vmatpush1.msra.mxu0 %v218
    %286 = vmatprep.subr.mxu0 %v217
    %287 = vmatpush1.msra.mxu0 %v216
    %288 = vmatprep.subr.mxu0 %v215
    %289 = vmatpush1.msra.mxu0 %v214
    %290 = vmatprep.subr.mxu0 %v213
    %291 = vmatpush1.msra.mxu0 %v212
    %292 = vmatprep.subr.mxu0 %v211
    %293 = vmatpush1.msra.mxu0 %v210
    %294 = vmatprep.subr.mxu0 %v209
    %295 = vmatpush1.msra.mxu0 %v208
    %296 = vmatprep.subr.mxu0 %v207
    %297 = vmatpush1.msra.mxu0 %v206
    %298 = vmatprep.subr.mxu0 %v205
    %299 = vmatpush1.msra.mxu0 %v204
    %300 = vmatprep.subr.mxu0 %v203
    %301 = vmatpush1.msra.mxu0 %v202
    %302 = vmatprep.subr.mxu0 %v201
    %303 = vmatpush1.msra.mxu0 %v200
    %304 = vmatprep.subr.mxu0 %v199
    %305 = vmatpush1.msra.mxu0 %v198
    %306 = vmatprep.subr.mxu0 %v261
    %307 = vmatpush2.msra.mxu0 %v260
    %308 = vmatprep.subr.mxu0 %v259
    %309 = vmatpush2.msra.mxu0 %v258
    %310 = vmatprep.subr.mxu0 %v257
    %311 = vmatpush2.msra.mxu0 %v256
    %312 = vmatprep.subr.mxu0 %v255
    %313 = vmatpush2.msra.mxu0 %v254
    %314 = vmatprep.subr.mxu0 %v253
    %315 = vmatpush2.msra.mxu0 %v252
    %316 = vmatprep.subr.mxu0 %v251
    %317 = vmatpush2.msra.mxu0 %v250
    %318 = vmatprep.subr.mxu0 %v249
    %319 = vmatpush2.msra.mxu0 %v248
    %320 = vmatprep.subr.mxu0 %v247
    %321 = vmatpush2.msra.mxu0 %v246
    %322 = vmatprep.subr.mxu0 %v245
    %323 = vmatpush2.msra.mxu0 %v244
    %324 = vmatprep.subr.mxu0 %v243
    %325 = vmatpush2.msra.mxu0 %v242
    %326 = vmatprep.subr.mxu0 %v241
    %327 = vmatpush2.msra.mxu0 %v240
    %328 = vmatprep.subr.mxu0 %v239
    %329 = vmatpush2.msra.mxu0 %v238
    %330 = vmatprep.subr.mxu0 %v237
    %331 = vmatpush2.msra.mxu0 %v236
    %332 = vmatprep.subr.mxu0 %v235
    %333 = vmatpush2.msra.mxu0 %v234
    %334 = vmatprep.subr.mxu0 %v233
    %335 = vmatpush2.msra.mxu0 %v232
    %336 = vmatprep.subr.mxu0 %v231
    %337 = vmatpush2.msra.mxu0 %v230
    %338 = vmatprep.mubr.f32.mxu0 %v197
    %339 = vmatmul.mubr.f32.gmra.mxu0 %v196
    %v340 = vpop.f32.mrf.mxu0
    %v341 = vadd.f32 %v267, %v340
    %v342 = vpop.f32.mrf.mxu0
    %v343 = vadd.f32 %v271, %v342
    %344 = vdwg.mxu0
    %v345 = vmax.f32 %v341, 0.0
    %v346 = vmax.f32 %v343, 0.0
    %v347 = vld [vmem:[#allocation8] sm:$0xff]
    %v348 = vld [vmem:[#allocation8 + $0x8] sm:$0xff]
    %v349 = vld [vmem:[#allocation8 + $0x10] sm:$0xff]
    %v350 = vld [vmem:[#allocation8 + $0x18] sm:$0xff]
    %v351 = vld [vmem:[#allocation8 + $0x20] sm:$0xff]
    %v352 = vld [vmem:[#allocation8 + $0x28] sm:$0xff]
    %v353 = vld [vmem:[#allocation8 + $0x30] sm:$0xff]
    %v354 = vld [vmem:[#allocation8 + $0x38] sm:$0xff]
    %v355 = vld [vmem:[#allocation8 + $0x40] sm:$0xff]
    %v356 = vld [vmem:[#allocation8 + $0x48] sm:$0xff]
    %v357 = vld [vmem:[#allocation8 + $0x50] sm:$0xff]
    %v358 = vld [vmem:[#allocation8 + $0x58] sm:$0xff]
    %v359 = vld [vmem:[#allocation8 + $0x60] sm:$0xff]
    %v360 = vld [vmem:[#allocation8 + $0x68] sm:$0xff]
    %v361 = vld [vmem:[#allocation8 + $0x70] sm:$0xff]
    %v362 = vld [vmem:[#allocation8 + $0x78] sm:$0xff]
    %v363 = vld [vmem:[#allocation8 + $0x80] sm:$0xff]
    %v364 = vld [vmem:[#allocation8 + $0x88] sm:$0xff]
    %v365 = vld [vmem:[#allocation8 + $0x90] sm:$0xff]
    %v366 = vld [vmem:[#allocation8 + $0x98] sm:$0xff]
    %v367 = vld [vmem:[#allocation8 + $0xa0] sm:$0xff]
    %v368 = vld [vmem:[#allocation8 + $0xa8] sm:$0xff]
    %v369 = vld [vmem:[#allocation8 + $0xb0] sm:$0xff]
    %v370 = vld [vmem:[#allocation8 + $0xb8] sm:$0xff]
    %v371 = vld [vmem:[#allocation8 + $0xc0] sm:$0xff]
    %v372 = vld [vmem:[#allocation8 + $0xc8] sm:$0xff]
    %v373 = vld [vmem:[#allocation8 + $0xd0] sm:$0xff]
    %v374 = vld [vmem:[#allocation8 + $0xd8] sm:$0xff]
    %v375 = vld [vmem:[#allocation8 + $0xe0] sm:$0xff]
    %v376 = vld [vmem:[#allocation8 + $0xe8] sm:$0xff]
    %v377 = vld [vmem:[#allocation8 + $0xf0] sm:$0xff]
    %v378 = vld [vmem:[#allocation8 + $0xf8] sm:$0xff]
    %v379 = vld [vmem:[%s6] sm:$0x1]
    %v381 = vlaneseq
    %v382 = vshrl.u32 %v381, 7
    %v383 = vsub.s32 0, %v382
    %v384 = vrot.slane %v379, %v383
    %386 = vmatprep.subr.mxu0 0.0
    %387 = vmatpush1.msra.mxu0 %v362
    %388 = vmatprep.subr.mxu0 0.0
    %389 = vmatpush1.msra.mxu0 %v361
    %390 = vmatprep.subr.mxu0 0.0
    %391 = vmatpush1.msra.mxu0 %v360
    %392 = vmatprep.subr.mxu0 0.0
    %393 = vmatpush1.msra.mxu0 %v359
    %394 = vmatprep.subr.mxu0 0.0
    %395 = vmatpush1.msra.mxu0 %v358
    %396 = vmatprep.subr.mxu0 0.0
    %397 = vmatpush1.msra.mxu0 %v357
    %398 = vmatprep.subr.mxu0 0.0
    %399 = vmatpush1.msra.mxu0 %v356
    %400 = vmatprep.subr.mxu0 0.0
    %401 = vmatpush1.msra.mxu0 %v355
    %402 = vmatprep.subr.mxu0 0.0
    %403 = vmatpush1.msra.mxu0 %v354
    %404 = vmatprep.subr.mxu0 0.0
    %405 = vmatpush1.msra.mxu0 %v353
    %406 = vmatprep.subr.mxu0 0.0
    %407 = vmatpush1.msra.mxu0 %v352
    %408 = vmatprep.subr.mxu0 0.0
    %409 = vmatpush1.msra.mxu0 %v351
    %410 = vmatprep.subr.mxu0 0.0
    %411 = vmatpush1.msra.mxu0 %v350
    %412 = vmatprep.subr.mxu0 0.0
    %413 = vmatpush1.msra.mxu0 %v349
    %414 = vmatprep.subr.mxu0 0.0
    %415 = vmatpush1.msra.mxu0 %v348
    %416 = vmatprep.subr.mxu0 0.0
    %417 = vmatpush1.msra.mxu0 %v347
    %418 = vmatprep.subr.mxu0 0.0
    %419 = vmatpush2.msra.mxu0 %v378
    %420 = vmatprep.subr.mxu0 0.0
    %421 = vmatpush2.msra.mxu0 %v377
    %422 = vmatprep.subr.mxu0 0.0
    %423 = vmatpush2.msra.mxu0 %v376
    %424 = vmatprep.subr.mxu0 0.0
    %425 = vmatpush2.msra.mxu0 %v375
    %426 = vmatprep.subr.mxu0 0.0
    %427 = vmatpush2.msra.mxu0 %v374
    %428 = vmatprep.subr.mxu0 0.0
    %429 = vmatpush2.msra.mxu0 %v373
    %430 = vmatprep.subr.mxu0 0.0
    %431 = vmatpush2.msra.mxu0 %v372
    %432 = vmatprep.subr.mxu0 0.0
    %433 = vmatpush2.msra.mxu0 %v371
    %434 = vmatprep.subr.mxu0 0.0
    %435 = vmatpush2.msra.mxu0 %v370
    %436 = vmatprep.subr.mxu0 0.0
    %437 = vmatpush2.msra.mxu0 %v369
    %438 = vmatprep.subr.mxu0 0.0
    %439 = vmatpush2.msra.mxu0 %v368
    %440 = vmatprep.subr.mxu0 0.0
    %441 = vmatpush2.msra.mxu0 %v367
    %442 = vmatprep.subr.mxu0 0.0
    %443 = vmatpush2.msra.mxu0 %v366
    %444 = vmatprep.subr.mxu0 0.0
    %445 = vmatpush2.msra.mxu0 %v365
    %446 = vmatprep.subr.mxu0 0.0
    %447 = vmatpush2.msra.mxu0 %v364
    %448 = vmatprep.subr.mxu0 0.0
    %449 = vmatpush2.msra.mxu0 %v363
    %450 = vmatprep.mubr.f32.mxu0 %v346
    %451 = vmatmul.mubr.f32.gmra.mxu0 %v345
    %v452 = vpop.f32.mrf.mxu0
    %v453 = vadd.f32 %v384, %v452
    %v454 = vpop.f32.mrf.mxu0
    %455 = vdwg.mxu0
    %v456 = vmax.f32 %v453, 0.0
    %vm457 = vcmask 64512
    %458 = vst.msk [vmem:[#allocation10] sm:$0xff] %vm457, %v456
    // Predicated region
    $region46: #{tpu_custom_call.1} parent=1 // pred_check
      _
    $region47: #{tpu_custom_call.1} parent=1 // pred_check_branch
      %460 = sbr.rel (0) target = $region49
    $region48: #{tpu_custom_call.1} parent=1 // pred_region
      %s462 = ssub.s32 128, 128
      %463 = vsyncadd [#allocation4], %s462
      %s465 = sshll.u32 [#allocation10], 4
      %s466 = int_to_ptr.vmem [resolvable:$true] %s465
      %468 = dma.vmem_to_hbm [thread:$0]  %s466, 128, %s7, [#allocation4]
    $region49: #{tpu_custom_call.1} parent=1 // pred_fallthru
      _
    // Predicated region
    $region50: #{tpu_custom_call.1} parent=1 // pred_check
      _
    $region51: #{tpu_custom_call.1} parent=1 // pred_check_branch
      %470 = sbr.rel (0) target = $region53
    $region52: #{tpu_custom_call.1} parent=1 // pred_region
      %471 = dma.done [#allocation4], 128
    $region53: #{tpu_custom_call.1} parent=1 // pred_fallthru
      _
    %472 = vsyncpa [#allocation3], 1
    %473 = vsyncpa [#allocation6], 1
    %474 = vsyncpa [#allocation9], 1
    %475 = vsyncpa [#allocation4], 1

</llo_original>
